<compile_context>
chip_gen: v6e
topology: v6e:2x2x1
jax: 0.10.0
libtpu: 0.0.40
codegen_flags: <defaults>
</compile_context>

<pallas_src>
import jax
import jax.numpy as jnp
from jax.experimental import pallas as pl
from jax.experimental.pallas import tpu as pltpu


def mlp_kernel(s_ref, w1_ref, b1_ref, w2_ref, b2_ref, w3_ref, b3_ref, out_ref):
    """One batch tile of the fused 3-layer MLP (bf16 MXU, f32 accumulate)."""
    x = s_ref[...]  # [TB, s_dim] bf16

    # Layer 1: Linear(s_dim, h_dim) + ReLU
    h1 = jnp.dot(x, w1_ref[...], preferred_element_type=jnp.float32) + b1_ref[...]
    h1 = jnp.maximum(h1, 0.0).astype(jnp.bfloat16)

    # Layer 2: Linear(h_dim, h_dim) + ReLU
    h2 = jnp.dot(h1, w2_ref[...], preferred_element_type=jnp.float32) + b2_ref[...]
    h2 = jnp.maximum(h2, 0.0).astype(jnp.bfloat16)

    # Layer 3: Linear(h_dim, a_dim_padded), no activation
    out = jnp.dot(h2, w3_ref[...], preferred_element_type=jnp.float32) + b3_ref[...]
    out_ref[...] = out.astype(out_ref.dtype)


def _round_up(x, m):
    return ((x + m - 1) // m) * m


def multi_discrete_policy_forward(s, params, *, block_rows=512):
    """Pallas forward. Returns [B, a_dim] float32 logits (= PyTorch forward)."""
    w1, b1, w2, b2, w3, b3 = params
    B, s_dim = s.shape
    h_dim = w1.shape[1]
    a_dim = w3.shape[1]

    # Lane-dense output: pad the last output dim to a multiple of 128.
    a_pad = _round_up(a_dim, 128)

    # Batch tile: multiple of 8 sublanes, capped at block_rows, batch padded
    # to a whole number of tiles so every block is full.
    TB = min(block_rows, max(8, _round_up(B, 8)))
    B_pad = _round_up(B, TB)

    # Cast batch-dependent operand + weights to bf16; biases stay f32.
    s_bf = jnp.zeros((B_pad, s_dim), jnp.bfloat16).at[:B, :].set(
        s.astype(jnp.bfloat16))
    w1_bf = w1.astype(jnp.bfloat16)
    w2_bf = w2.astype(jnp.bfloat16)
    w3_bf = jnp.zeros((h_dim, a_pad), jnp.bfloat16).at[:, :a_dim].set(
        w3.astype(jnp.bfloat16))
    b1_f = b1.astype(jnp.float32)
    b2_f = b2.astype(jnp.float32)
    b3_f = jnp.zeros((1, a_pad), jnp.float32).at[:, :a_dim].set(
        b3.astype(jnp.float32))

    grid = (B_pad // TB,)

    flops = 2 * B_pad * (s_dim * h_dim + h_dim * h_dim + h_dim * a_pad)
    bytes_accessed = (
        s_bf.size * 2 + w1_bf.size * 2 + w2_bf.size * 2 + w3_bf.size * 2
        + b1_f.size * 4 + b2_f.size * 4 + b3_f.size * 4
        + B_pad * a_pad * 4)

    out = pl.pallas_call(
        mlp_kernel,
        out_shape=jax.ShapeDtypeStruct((B_pad, a_pad), jnp.float32),
        grid=grid,
        in_specs=[
            pl.BlockSpec((TB, s_dim), lambda i: (i, 0)),       # activations: tiled
            pl.BlockSpec((s_dim, h_dim), lambda i: (0, 0)),    # weights/biases:
            pl.BlockSpec((1, h_dim), lambda i: (0, 0)),        #   resident across
            pl.BlockSpec((h_dim, h_dim), lambda i: (0, 0)),    #   all grid steps
            pl.BlockSpec((1, h_dim), lambda i: (0, 0)),
            pl.BlockSpec((h_dim, a_pad), lambda i: (0, 0)),
            pl.BlockSpec((1, a_pad), lambda i: (0, 0)),
        ],
        out_specs=pl.BlockSpec((TB, a_pad), lambda i: (i, 0)),
        compiler_params=pltpu.CompilerParams(
            dimension_semantics=("parallel",)),
        cost_estimate=pl.CostEstimate(
            flops=flops, transcendentals=0, bytes_accessed=bytes_accessed),
    )(s_bf, w1_bf, b1_f, w2_bf, b2_f, w3_bf, b3_f)

    # Strip batch and lane padding.
    return out[:B, :a_dim]


def init_params(key, s_dim, h_dim, a_dim):
    """Deterministic PyTorch-style init: U(-1/sqrt(fan_in), 1/sqrt(fan_in))."""
    ks = jax.random.split(key, 6)

    def lin(kw, kb, fan_in, fan_out):
        bound = 1.0 / jnp.sqrt(fan_in)
        w = jax.random.uniform(kw, (fan_in, fan_out), jnp.float32, -bound, bound)
        b = jax.random.uniform(kb, (1, fan_out), jnp.float32, -bound, bound)
        return w, b

    w1, b1 = lin(ks[0], ks[1], s_dim, h_dim)
    w2, b2 = lin(ks[2], ks[3], h_dim, h_dim)
    w3, b3 = lin(ks[4], ks[5], h_dim, a_dim)
    return (w1, b1, w2, b2, w3, b3)


if __name__ == "__main__":
    # Small shapes consistent with the module's forward: s is [B, s_dim].
    B, s_dim, h_dim, a_dim = 2, 16, 32, 8

    key = jax.random.PRNGKey(0)
    k_s, k_p = jax.random.split(key)
    s = jax.random.normal(k_s, (B, s_dim), dtype=jnp.float32)
    params = init_params(k_p, s_dim, h_dim, a_dim)

    out = multi_discrete_policy_forward(s, params)
    out = jax.block_until_ready(out)

    # Pure-JAX f32 reference of the forward semantics (kernel uses bf16
    # operands with f32 accumulation, hence the slightly loose tolerance).
    w1, b1, w2, b2, w3, b3 = params
    ref = jnp.maximum(s @ w1 + b1, 0.0)
    ref = jnp.maximum(ref @ w2 + b2, 0.0)
    ref = ref @ w3 + b3
    assert out.shape == (B, a_dim)
    assert jnp.allclose(out, ref, atol=2e-2, rtol=2e-2), (
        float(jnp.max(jnp.abs(out - ref))))

    print("KERNEL_OK")
</pallas_src>

<mosaic_0001>
module attributes {stable_mosaic.version = 11 : i64} {
  func.func @mlp_kernel(%arg0: i32, %arg1: memref<8x16xbf16, #tpu.memory_space<vmem>>, %arg2: memref<16x32xbf16, #tpu.memory_space<vmem>>, %arg3: memref<1x32xf32, #tpu.memory_space<vmem>>, %arg4: memref<32x32xbf16, #tpu.memory_space<vmem>>, %arg5: memref<1x32xf32, #tpu.memory_space<vmem>>, %arg6: memref<32x128xbf16, #tpu.memory_space<vmem>>, %arg7: memref<1x128xf32, #tpu.memory_space<vmem>>, %arg8: memref<8x128xf32, #tpu.memory_space<vmem>>) attributes {dimension_semantics = [#tpu.dimension_semantics<parallel>], iteration_bounds = array<i64: 1>, scalar_prefetch = 0 : i64, scratch_operands = 0 : i64, tpu.core_type = #tpu.core_type<tc>, window_params = [{transform_indices = @transform_0, window_bounds = array<i64: 8, 16>}, {pipeline_mode = #tpu.pipeline_mode<synchronous>, transform_indices = @transform_1, window_bounds = array<i64: 16, 32>}, {pipeline_mode = #tpu.pipeline_mode<synchronous>, transform_indices = @transform_2, window_bounds = array<i64: 1, 32>}, {pipeline_mode = #tpu.pipeline_mode<synchronous>, transform_indices = @transform_3, window_bounds = array<i64: 32, 32>}, {pipeline_mode = #tpu.pipeline_mode<synchronous>, transform_indices = @transform_4, window_bounds = array<i64: 1, 32>}, {pipeline_mode = #tpu.pipeline_mode<synchronous>, transform_indices = @transform_5, window_bounds = array<i64: 32, 128>}, {pipeline_mode = #tpu.pipeline_mode<synchronous>, transform_indices = @transform_6, window_bounds = array<i64: 1, 128>}, {transform_indices = @transform_7, window_bounds = array<i64: 8, 128>}]} {
    %c0 = arith.constant 0 : index
    %c0_0 = arith.constant 0 : index
    %0 = vector.load %arg1[%c0, %c0_0] : memref<8x16xbf16, #tpu.memory_space<vmem>>, vector<8x16xbf16>
    %c0_1 = arith.constant 0 : index
    %c0_2 = arith.constant 0 : index
    %1 = vector.load %arg2[%c0_1, %c0_2] : memref<16x32xbf16, #tpu.memory_space<vmem>>, vector<16x32xbf16>
    %cst = arith.constant dense<0.000000e+00> : vector<8x32xf32>
    %2 = tpu.matmul %0, %1, %cst {dimension_numbers = #tpu.dot_dimension_numbers<[1], [0], [0], [1], [0, 0, 1, 1], [], []>} : vector<8x16xbf16>, vector<16x32xbf16>, vector<8x32xf32> -> vector<8x32xf32>
    %c0_3 = arith.constant 0 : index
    %c0_4 = arith.constant 0 : index
    %3 = vector.load %arg3[%c0_3, %c0_4] : memref<1x32xf32, #tpu.memory_space<vmem>>, vector<1x32xf32>
    %4 = vector.broadcast %3 : vector<1x32xf32> to vector<8x32xf32>
    %5 = arith.addf %2, %4 : vector<8x32xf32>
    %cst_5 = arith.constant 0.000000e+00 : f32
    %6 = vector.broadcast %cst_5 : f32 to vector<8x32xf32>
    %7 = arith.maximumf %5, %6 : vector<8x32xf32>
    %8 = arith.truncf %7 : vector<8x32xf32> to vector<8x32xbf16>
    %c0_6 = arith.constant 0 : index
    %c0_7 = arith.constant 0 : index
    %9 = vector.load %arg4[%c0_6, %c0_7] : memref<32x32xbf16, #tpu.memory_space<vmem>>, vector<32x32xbf16>
    %cst_8 = arith.constant dense<0.000000e+00> : vector<8x32xf32>
    %10 = tpu.matmul %8, %9, %cst_8 {dimension_numbers = #tpu.dot_dimension_numbers<[1], [0], [0], [1], [0, 0, 1, 1], [], []>} : vector<8x32xbf16>, vector<32x32xbf16>, vector<8x32xf32> -> vector<8x32xf32>
    %c0_9 = arith.constant 0 : index
    %c0_10 = arith.constant 0 : index
    %11 = vector.load %arg5[%c0_9, %c0_10] : memref<1x32xf32, #tpu.memory_space<vmem>>, vector<1x32xf32>
    %12 = vector.broadcast %11 : vector<1x32xf32> to vector<8x32xf32>
    %13 = arith.addf %10, %12 : vector<8x32xf32>
    %cst_11 = arith.constant 0.000000e+00 : f32
    %14 = vector.broadcast %cst_11 : f32 to vector<8x32xf32>
    %15 = arith.maximumf %13, %14 : vector<8x32xf32>
    %16 = arith.truncf %15 : vector<8x32xf32> to vector<8x32xbf16>
    %c0_12 = arith.constant 0 : index
    %c0_13 = arith.constant 0 : index
    %17 = vector.load %arg6[%c0_12, %c0_13] : memref<32x128xbf16, #tpu.memory_space<vmem>>, vector<32x128xbf16>
    %cst_14 = arith.constant dense<0.000000e+00> : vector<8x128xf32>
    %18 = tpu.matmul %16, %17, %cst_14 {dimension_numbers = #tpu.dot_dimension_numbers<[1], [0], [0], [1], [0, 0, 1, 1], [], []>} : vector<8x32xbf16>, vector<32x128xbf16>, vector<8x128xf32> -> vector<8x128xf32>
    %c0_15 = arith.constant 0 : index
    %c0_16 = arith.constant 0 : index
    %19 = vector.load %arg7[%c0_15, %c0_16] : memref<1x128xf32, #tpu.memory_space<vmem>>, vector<1x128xf32>
    %20 = vector.broadcast %19 : vector<1x128xf32> to vector<8x128xf32>
    %21 = arith.addf %18, %20 : vector<8x128xf32>
    %c0_17 = arith.constant 0 : index
    %c0_18 = arith.constant 0 : index
    %22 = vector.load %arg8[%c0_17, %c0_18] : memref<8x128xf32, #tpu.memory_space<vmem>>, vector<8x128xf32>
    tpu.vector_store %arg8[%c0_17, %c0_18], %21 {strides = array<i32>} : memref<8x128xf32, #tpu.memory_space<vmem>>, vector<8x128xf32>,
    return
  }
  func.func @transform_0(%arg0: i32) -> (i32, i32) {
    %c0_i32 = arith.constant 0 : i32
    %c0_i32_0 = arith.constant 0 : i32
    return %arg0, %c0_i32 : i32, i32
  }
  func.func @transform_1(%arg0: i32) -> (i32, i32) {
    %c0_i32 = arith.constant 0 : i32
    %c0_i32_0 = arith.constant 0 : i32
    %c0_i32_1 = arith.constant 0 : i32
    return %c0_i32, %c0_i32_0 : i32, i32
  }
  func.func @transform_2(%arg0: i32) -> (i32, i32) {
    %c0_i32 = arith.constant 0 : i32
    %c0_i32_0 = arith.constant 0 : i32
    %c0_i32_1 = arith.constant 0 : i32
    return %c0_i32, %c0_i32_0 : i32, i32
  }
  func.func @transform_3(%arg0: i32) -> (i32, i32) {
    %c0_i32 = arith.constant 0 : i32
    %c0_i32_0 = arith.constant 0 : i32
    %c0_i32_1 = arith.constant 0 : i32
    return %c0_i32, %c0_i32_0 : i32, i32
  }
  func.func @transform_4(%arg0: i32) -> (i32, i32) {
    %c0_i32 = arith.constant 0 : i32
    %c0_i32_0 = arith.constant 0 : i32
    %c0_i32_1 = arith.constant 0 : i32
    return %c0_i32, %c0_i32_0 : i32, i32
  }
  func.func @transform_5(%arg0: i32) -> (i32, i32) {
    %c0_i32 = arith.constant 0 : i32
    %c0_i32_0 = arith.constant 0 : i32
    %c0_i32_1 = arith.constant 0 : i32
    return %c0_i32, %c0_i32_0 : i32, i32
  }
  func.func @transform_6(%arg0: i32) -> (i32, i32) {
    %c0_i32 = arith.constant 0 : i32
    %c0_i32_0 = arith.constant 0 : i32
    %c0_i32_1 = arith.constant 0 : i32
    return %c0_i32, %c0_i32_0 : i32, i32
  }
  func.func @transform_7(%arg0: i32) -> (i32, i32) {
    %c0_i32 = arith.constant 0 : i32
    %c0_i32_0 = arith.constant 0 : i32
    return %arg0, %c0_i32 : i32, i32
  }
}

</mosaic_0001>

<llo_original>
// kernel: tpu_custom_call.1
$region0: #{tpu_custom_call.1}
  #allocation0 [shape = 'u32[]', space=smem, size = 0x4, offset = 0x4, fixed_abs, tag = 'smem constant byte address 0x4 - core index']
  #allocation1 [shape = 'u32[144,128]{1,0:T(1,128)}', space=vmem, size = 0x12000, scoped, tag = 'internal scratch']
  %s0 = inlined_call_operand.hbm [shape: bf16[8,16], index: 0, kind: input, shape index: {}]
  %s1 = inlined_call_operand.hbm [shape: bf16[16,32], index: 1, kind: input, shape index: {}]
  %s2 = inlined_call_operand.vmem [shape: f32[1,32], index: 2, kind: input, shape index: {}]
  %s3 = inlined_call_operand.hbm [shape: bf16[32,32], index: 3, kind: input, shape index: {}]
  %s4 = inlined_call_operand.vmem [shape: f32[1,32], index: 4, kind: input, shape index: {}]
  %s5 = inlined_call_operand.hbm [shape: bf16[32,128], index: 5, kind: input, shape index: {}]
  %s6 = inlined_call_operand.vmem [shape: f32[1,128], index: 6, kind: input, shape index: {}]
  %s7 = inlined_call_operand.hbm [shape: f32[8,128], index: 7, kind: output, shape index: {}]
  %s8 = sld [smem:[#allocation0]]
  $region54: #{tpu_custom_call.1} parent=0
    _
  %s10 = ssub.s32 1, %s8
  %s11 = scalar_select 0, %s10, %s8
  $region1: #{tpu_custom_call.1} parent=0
    #allocation2 [shape = 'u8[2048]{0}', space=vmem, size = 0x800, scoped, tag = 'input window, operand 0, single buffered']
    #allocation3 [shape = 's32[1]{0}', space=sflag, size = 0x4, scoped, tag = 'scoped memory for tpu_custom_call.1']
    #allocation4 [shape = 's32[1]{0}', space=sflag, size = 0x4, scoped, tag = 'scoped memory for tpu_custom_call.1']
    #allocation5 [shape = 'u8[4096]{0}', space=vmem, size = 0x1000, scoped, tag = 'input window, operand 1, single buffered']
    #allocation6 [shape = 's32[1]{0}', space=sflag, size = 0x4, scoped, tag = 'scoped memory for tpu_custom_call.1']
    #allocation7 [shape = 'u8[8192]{0}', space=vmem, size = 0x2000, scoped, tag = 'input window, operand 3, single buffered']
    #allocation8 [shape = 'u8[8192]{0}', space=vmem, size = 0x2000, scoped, tag = 'input window, operand 5, single buffered']
    #allocation9 [shape = 's32[1]{0}', space=sflag, size = 0x4, scoped, tag = 'scoped memory for tpu_custom_call.1']
    #allocation10 [shape = 'u8[4096]{0}', space=vmem, size = 0x1000, scoped, tag = 'output window, operand 0, single buffered']
    %12 = vsyncpa [#allocation3], 0
    %13 = vsyncpa [#allocation6], 0
    %14 = vsyncpa [#allocation9], 0
    %15 = vsyncpa [#allocation4], 0
    // Predicated region
    $region2: #{tpu_custom_call.1} parent=1 // pred_check
      _
    $region3: #{tpu_custom_call.1} parent=1 // pred_check_branch
      %17 = sbr.rel (0) target = $region5
    $region4: #{tpu_custom_call.1} parent=1 // pred_region
      %s19 = ssub.s32 64, 64
      %20 = vsyncadd [#allocation3], %s19
      %s22 = sshll.u32 [#allocation2], 4
      %s23 = int_to_ptr.vmem [resolvable:$true] %s22
      %25 = dma.hbm_to_vmem [thread:$0]  %s0, 64, %s23, [#allocation3]
    $region5: #{tpu_custom_call.1} parent=1 // pred_fallthru
      _
    // Predicated region
    $region6: #{tpu_custom_call.1} parent=1 // pred_check
      _
    $region7: #{tpu_custom_call.1} parent=1 // pred_check_branch
      %27 = sbr.rel (0) target = $region9
    $region8: #{tpu_custom_call.1} parent=1 // pred_region
      %s29 = ssub.s32 128, 128
      %30 = vsyncadd [#allocation6], %s29
      %s31 = sshll.u32 [#allocation5], 4
      %s32 = int_to_ptr.vmem [resolvable:$true] %s31
      %37 = dma.hbm_to_vmem [thread:$0]  %s1, 128, %s32, [#allocation6], 64, 64, 4
    $region9: #{tpu_custom_call.1} parent=1 // pred_fallthru
      _
    // Predicated region
    $region10: #{tpu_custom_call.1} parent=1 // pred_check
      _
    $region11: #{tpu_custom_call.1} parent=1 // pred_check_branch
      %39 = sbr.rel (0) target = $region13
    $region12: #{tpu_custom_call.1} parent=1 // pred_region
      _
    $region13: #{tpu_custom_call.1} parent=1 // pred_fallthru
      _
    // Predicated region
    $region14: #{tpu_custom_call.1} parent=1 // pred_check
      _
    $region15: #{tpu_custom_call.1} parent=1 // pred_check_branch
      %41 = sbr.rel (0) target = $region17
    $region16: #{tpu_custom_call.1} parent=1 // pred_region
      %s43 = ssub.s32 256, 256
      %44 = vsyncadd [#allocation6], %s43
      %s45 = sshll.u32 [#allocation7], 4
      %s46 = int_to_ptr.vmem [resolvable:$true] %s45
      %51 = dma.hbm_to_vmem [thread:$0]  %s3, 256, %s46, [#allocation6], 64, 64, 4
    $region17: #{tpu_custom_call.1} parent=1 // pred_fallthru
      _
    // Predicated region
    $region18: #{tpu_custom_call.1} parent=1 // pred_check
      _
    $region19: #{tpu_custom_call.1} parent=1 // pred_check_branch
      %53 = sbr.rel (0) target = $region21
    $region20: #{tpu_custom_call.1} parent=1 // pred_region
      _
    $region21: #{tpu_custom_call.1} parent=1 // pred_fallthru
      _
    // Predicated region
    $region22: #{tpu_custom_call.1} parent=1 // pred_check
      _
    $region23: #{tpu_custom_call.1} parent=1 // pred_check_branch
      %55 = sbr.rel (0) target = $region25
    $region24: #{tpu_custom_call.1} parent=1 // pred_region
      %s57 = ssub.s32 256, 256
      %58 = vsyncadd [#allocation9], %s57
      %s59 = sshll.u32 [#allocation8], 4
      %s60 = int_to_ptr.vmem [resolvable:$true] %s59
      %65 = dma.hbm_to_vmem [thread:$0]  %s5, 256, %s60, [#allocation9], 64, 64, 4
    $region25: #{tpu_custom_call.1} parent=1 // pred_fallthru
      _
    // Predicated region
    $region26: #{tpu_custom_call.1} parent=1 // pred_check
      _
    $region27: #{tpu_custom_call.1} parent=1 // pred_check_branch
      %67 = sbr.rel (0) target = $region29
    $region28: #{tpu_custom_call.1} parent=1 // pred_region
      _
    $region29: #{tpu_custom_call.1} parent=1 // pred_fallthru
      _
    // Predicated region
    $region30: #{tpu_custom_call.1} parent=1 // pred_check
      _
    $region31: #{tpu_custom_call.1} parent=1 // pred_check_branch
      %69 = sbr.rel (0) target = $region33
    $region32: #{tpu_custom_call.1} parent=1 // pred_region
      %70 = dma.done [#allocation3], 64
    $region33: #{tpu_custom_call.1} parent=1 // pred_fallthru
      _
    // Predicated region
    $region34: #{tpu_custom_call.1} parent=1 // pred_check
      _
    $region35: #{tpu_custom_call.1} parent=1 // pred_check_branch
      %72 = sbr.rel (0) target = $region37
    $region36: #{tpu_custom_call.1} parent=1 // pred_region
      %73 = dma.done [#allocation6], 128
    $region37: #{tpu_custom_call.1} parent=1 // pred_fallthru
      _
    // Predicated region
    $region38: #{tpu_custom_call.1} parent=1 // pred_check
      _
    $region39: #{tpu_custom_call.1} parent=1 // pred_check_branch
      %75 = sbr.rel (0) target = $region41
    $region40: #{tpu_custom_call.1} parent=1 // pred_region
      %76 = dma.done [#allocation6], 256
    $region41: #{tpu_custom_call.1} parent=1 // pred_fallthru
      _
    // Predicated region
    $region42: #{tpu_custom_call.1} parent=1 // pred_check
      _
    $region43: #{tpu_custom_call.1} parent=1 // pred_check_branch
      %78 = sbr.rel (0) target = $region45
    $region44: #{tpu_custom_call.1} parent=1 // pred_region
      %79 = dma.done [#allocation9], 256
    $region45: #{tpu_custom_call.1} parent=1 // pred_fallthru
      _
    %v81 = vld [vmem:[#allocation2] sm:$0xf]
    %v82 = vld [vmem:[#allocation5] sm:$0xf]
    %v83 = vld [vmem:[#allocation5 + $0x4] sm:$0xf]
    %v84 = vld [vmem:[%s2] sm:$0x1]
    %v86 = vlaneseq
    %v87 = vshrl.u32 %v86, 7
    %v88 = vsub.s32 0, %v87
    %v89 = vrot.slane %v84, %v88
    %v93 = vunpack.c.l.b16 %v82
    %v94 = vunpack.c.l.b16 %v83
    %v95 = vpack.c.b16 %v94, %v93
    %vm97 = vcmask 130048
    %v99 = vsel %vm97, %v81, 0
    %101 = vmatprep.subr.bf16.mxu0 0
    %102 = vmatpush1.bf16.msra.mxu0 0
    %103 = vmatprep.subr.bf16.mxu0 0
    %104 = vmatpush1.bf16.msra.mxu0 0
    %105 = vmatprep.subr.bf16.mxu0 0
    %106 = vmatpush1.bf16.msra.mxu0 0
    %107 = vmatprep.subr.bf16.mxu0 0
    %108 = vmatpush1.bf16.msra.mxu0 0
    %109 = vmatprep.subr.bf16.mxu0 0
    %110 = vmatpush1.bf16.msra.mxu0 0
    %111 = vmatprep.subr.bf16.mxu0 0
    %112 = vmatpush1.bf16.msra.mxu0 0
    %113 = vmatprep.subr.bf16.mxu0 0
    %114 = vmatpush1.bf16.msra.mxu0 0
    %115 = vmatprep.subr.bf16.mxu0 0
    %116 = vmatpush1.bf16.msra.mxu0 %v95
    %117 = vmatprep.subr.bf16.mxu0 0
    %118 = vmatpush2.bf16.msra.mxu0 0
    %119 = vmatprep.subr.bf16.mxu0 0
    %120 = vmatpush2.bf16.msra.mxu0 0
    %121 = vmatprep.subr.bf16.mxu0 0
    %122 = vmatpush2.bf16.msra.mxu0 0
    %123 = vmatprep.subr.bf16.mxu0 0
    %124 = vmatpush2.bf16.msra.mxu0 0
    %125 = vmatprep.subr.bf16.mxu0 0
    %126 = vmatpush2.bf16.msra.mxu0 0
    %127 = vmatprep.subr.bf16.mxu0 0
    %128 = vmatpush2.bf16.msra.mxu0 0
    %129 = vmatprep.subr.bf16.mxu0 0
    %130 = vmatpush2.bf16.msra.mxu0 0
    %131 = vmatprep.subr.bf16.mxu0 0
    %132 = vmatpush2.bf16.msra.mxu0 0
    %133 = vmatprep.mubr.bf16.mxu0 0
    %134 = vmatmul.mubr.bf16.gmra.mxu0 %v99
    %v135 = vpop.f32.mrf.mxu0
    %v136 = vadd.f32 %v89, %v135
    %v137 = vpop.f32.mrf.mxu0
    %v138 = vpop.f32.mrf.mxu0
    %v139 = vpop.f32.mrf.mxu0
    %140 = vdwg.mxu0
    %v141 = vmax.f32 %v136, 0.0
    %v142 = vpack.c.bf16 %v141, %v141
    %v143 = vld [vmem:[#allocation7] sm:$0xf]
    %v144 = vld [vmem:[#allocation7 + $0x4] sm:$0xf]
    %v145 = vld [vmem:[#allocation7 + $0x8] sm:$0xf]
    %v146 = vld [vmem:[#allocation7 + $0xc] sm:$0xf]
    %v147 = vld [vmem:[%s4] sm:$0x1]
    %v149 = vlaneseq
    %v150 = vshrl.u32 %v149, 7
    %v151 = vsub.s32 0, %v150
    %v152 = vrot.slane %v147, %v151
    %v158 = vunpack.c.l.b16 %v143
    %v159 = vunpack.c.l.b16 %v144
    %v160 = vunpack.c.l.b16 %v145
    %v161 = vunpack.c.l.b16 %v146
    %v162 = vpack.c.b16 %v159, %v158
    %v163 = vpack.c.b16 %v161, %v160
    %vm166 = vcmask 261120
    %v168 = vsel %vm166, %v142, 0
    %170 = vmatprep.subr.bf16.mxu0 0
    %171 = vmatpush1.bf16.msra.mxu0 0
    %172 = vmatprep.subr.bf16.mxu0 0
    %173 = vmatpush1.bf16.msra.mxu0 0
    %174 = vmatprep.subr.bf16.mxu0 0
    %175 = vmatpush1.bf16.msra.mxu0 0
    %176 = vmatprep.subr.bf16.mxu0 0
    %177 = vmatpush1.bf16.msra.mxu0 0
    %178 = vmatprep.subr.bf16.mxu0 0
    %179 = vmatpush1.bf16.msra.mxu0 0
    %180 = vmatprep.subr.bf16.mxu0 0
    %181 = vmatpush1.bf16.msra.mxu0 0
    %182 = vmatprep.subr.bf16.mxu0 0
    %183 = vmatpush1.bf16.msra.mxu0 %v163
    %184 = vmatprep.subr.bf16.mxu0 0
    %185 = vmatpush1.bf16.msra.mxu0 %v162
    %186 = vmatprep.subr.bf16.mxu0 0
    %187 = vmatpush2.bf16.msra.mxu0 0
    %188 = vmatprep.subr.bf16.mxu0 0
    %189 = vmatpush2.bf16.msra.mxu0 0
    %190 = vmatprep.subr.bf16.mxu0 0
    %191 = vmatpush2.bf16.msra.mxu0 0
    %192 = vmatprep.subr.bf16.mxu0 0
    %193 = vmatpush2.bf16.msra.mxu0 0
    %194 = vmatprep.subr.bf16.mxu0 0
    %195 = vmatpush2.bf16.msra.mxu0 0
    %196 = vmatprep.subr.bf16.mxu0 0
    %197 = vmatpush2.bf16.msra.mxu0 0
    %198 = vmatprep.subr.bf16.mxu0 0
    %199 = vmatpush2.bf16.msra.mxu0 0
    %200 = vmatprep.subr.bf16.mxu0 0
    %201 = vmatpush2.bf16.msra.mxu0 0
    %202 = vmatprep.mubr.bf16.mxu0 0
    %203 = vmatmul.mubr.bf16.gmra.mxu0 %v168
    %v204 = vpop.f32.mrf.mxu0
    %v205 = vadd.f32 %v152, %v204
    %v206 = vpop.f32.mrf.mxu0
    %v207 = vpop.f32.mrf.mxu0
    %v208 = vpop.f32.mrf.mxu0
    %209 = vdwg.mxu0
    %v210 = vmax.f32 %v205, 0.0
    %v211 = vpack.c.bf16 %v210, %v210
    %v212 = vld [vmem:[#allocation8] sm:$0xf]
    %v213 = vld [vmem:[#allocation8 + $0x4] sm:$0xf]
    %v214 = vld [vmem:[#allocation8 + $0x8] sm:$0xf]
    %v215 = vld [vmem:[#allocation8 + $0xc] sm:$0xf]
    %v216 = vld [vmem:[%s6] sm:$0x1]
    %v218 = vlaneseq
    %v219 = vshrl.u32 %v218, 7
    %v220 = vsub.s32 0, %v219
    %v221 = vrot.slane %v216, %v220
    %v227 = vunpack.c.l.b16 %v212
    %v228 = vunpack.c.l.b16 %v213
    %v229 = vunpack.c.l.b16 %v214
    %v230 = vunpack.c.l.b16 %v215
    %v231 = vpack.c.b16 %v228, %v227
    %v232 = vpack.c.b16 %v230, %v229
    %v236 = vsel %vm166, %v211, 0
    %238 = vmatprep.subr.bf16.mxu0 0
    %239 = vmatpush1.bf16.msra.mxu0 0
    %240 = vmatprep.subr.bf16.mxu0 0
    %241 = vmatpush1.bf16.msra.mxu0 0
    %242 = vmatprep.subr.bf16.mxu0 0
    %243 = vmatpush1.bf16.msra.mxu0 0
    %244 = vmatprep.subr.bf16.mxu0 0
    %245 = vmatpush1.bf16.msra.mxu0 0
    %246 = vmatprep.subr.bf16.mxu0 0
    %247 = vmatpush1.bf16.msra.mxu0 0
    %248 = vmatprep.subr.bf16.mxu0 0
    %249 = vmatpush1.bf16.msra.mxu0 0
    %250 = vmatprep.subr.bf16.mxu0 0
    %251 = vmatpush1.bf16.msra.mxu0 %v232
    %252 = vmatprep.subr.bf16.mxu0 0
    %253 = vmatpush1.bf16.msra.mxu0 %v231
    %254 = vmatprep.subr.bf16.mxu0 0
    %255 = vmatpush2.bf16.msra.mxu0 0
    %256 = vmatprep.subr.bf16.mxu0 0
    %257 = vmatpush2.bf16.msra.mxu0 0
    %258 = vmatprep.subr.bf16.mxu0 0
    %259 = vmatpush2.bf16.msra.mxu0 0
    %260 = vmatprep.subr.bf16.mxu0 0
    %261 = vmatpush2.bf16.msra.mxu0 0
    %262 = vmatprep.subr.bf16.mxu0 0
    %263 = vmatpush2.bf16.msra.mxu0 0
    %264 = vmatprep.subr.bf16.mxu0 0
    %265 = vmatpush2.bf16.msra.mxu0 0
    %266 = vmatprep.subr.bf16.mxu0 0
    %267 = vmatpush2.bf16.msra.mxu0 0
    %268 = vmatprep.subr.bf16.mxu0 0
    %269 = vmatpush2.bf16.msra.mxu0 0
    %270 = vmatprep.mubr.bf16.mxu0 0
    %271 = vmatmul.mubr.bf16.gmra.mxu0 %v236
    %v272 = vpop.f32.mrf.mxu0
    %v273 = vadd.f32 %v221, %v272
    %v274 = vpop.f32.mrf.mxu0
    %v275 = vpop.f32.mrf.mxu0
    %v276 = vpop.f32.mrf.mxu0
    %277 = vdwg.mxu0
    %278 = vst [vmem:[#allocation10] sm:$0xff] %v273
    // Predicated region
    $region46: #{tpu_custom_call.1} parent=1 // pred_check
      _
    $region47: #{tpu_custom_call.1} parent=1 // pred_check_branch
      %280 = sbr.rel (0) target = $region49
    $region48: #{tpu_custom_call.1} parent=1 // pred_region
      %s282 = ssub.s32 128, 128
      %283 = vsyncadd [#allocation4], %s282
      %s285 = sshll.u32 [#allocation10], 4
      %s286 = int_to_ptr.vmem [resolvable:$true] %s285
      %288 = dma.vmem_to_hbm [thread:$0]  %s286, 128, %s7, [#allocation4]
    $region49: #{tpu_custom_call.1} parent=1 // pred_fallthru
      _
    // Predicated region
    $region50: #{tpu_custom_call.1} parent=1 // pred_check
      _
    $region51: #{tpu_custom_call.1} parent=1 // pred_check_branch
      %290 = sbr.rel (0) target = $region53
    $region52: #{tpu_custom_call.1} parent=1 // pred_region
      %291 = dma.done [#allocation4], 128
    $region53: #{tpu_custom_call.1} parent=1 // pred_fallthru
      _
    %292 = vsyncpa [#allocation3], 1
    %293 = vsyncpa [#allocation6], 1
    %294 = vsyncpa [#allocation9], 1
    %295 = vsyncpa [#allocation4], 1

</llo_original>
